<compile_context>
chip_gen: v6e
topology: v6e:2x2x1
jax: 0.10.0
libtpu: 0.0.40
codegen_flags: <defaults>
</compile_context>

<pallas_src>
import jax
import jax.numpy as jnp
from jax import lax
from jax.experimental import pallas as pl
from jax.experimental.pallas import tpu as pltpu


def _round_up(x, m):
    return (x + m - 1) // m * m


def _vmem_limit_bytes():
    """Generation-gated VMEM budget: ~40 MiB on v7x-class chips (64 MiB
    physical VMEM), ~96 MiB on v5e/v6e (128 MiB physical)."""
    try:
        cap = int(pltpu.get_tpu_info().vmem_capacity_bytes)
    except Exception:
        return 40 * 1024 * 1024          # safe everywhere
    if cap >= 100 * 1024 * 1024:
        return 96 * 1024 * 1024          # v5e / v6e: plenty of headroom
    return 40 * 1024 * 1024              # v7x-class


def _make_kernel(te, fo):
    # Static roll offsets for the segmented all-reduce (works for non-pow2 te).
    shifts = []
    d = 1
    while d < te:
        shifts.append(d)
        d *= 2

    def kernel(tile_lo_ref, tile_hi_ref, ptr_ref,              # scalar prefetch (SMEM)
               row_ref, feat_ref, w1_ref, b1_ref, w2_ref, b2_ref,
               agg_ref, out_ref, seg_ref):
        i = pl.program_id(0)
        neg_inf = jnp.float32(-jnp.inf)

        # ---- init resident accumulator on the first edge tile ----------------
        @pl.when(i == 0)
        def _():
            agg_ref[...] = jnp.full(agg_ref.shape, -jnp.inf, dtype=agg_ref.dtype)

        # ---- per-edge MLP on the MXU (bf16 inputs, f32 accumulation) ---------
        feat = feat_ref[...]                                   # [TE, 2F] bf16
        h = jnp.dot(feat, w1_ref[...], preferred_element_type=jnp.float32)
        h = jnp.maximum(h + b1_ref[...], 0.0)                  # [TE, H] f32
        out = jnp.dot(h.astype(w2_ref.dtype), w2_ref[...],
                      preferred_element_type=jnp.float32) + b2_ref[...]
        out_ref[...] = out.astype(out_ref.dtype)               # [TE, Fo] bf16

        # ---- segmented all-reduce max over the sorted rows -------------------
        # Rows are sorted, so "same row id" == "same segment"; after the
        # log2(TE) doubling steps every row of a segment holds that node's
        # within-tile max.  Wrap-around contributions can only come from the
        # same row id, hence they never corrupt the per-node max.
        r = row_ref[...]                                       # [TE, 1] int32
        val = out                                              # [TE, Fo] f32
        for dd in shifts:
            r_dn = pltpu.roll(r, shift=dd, axis=0)
            v_dn = pltpu.roll(val, shift=dd, axis=0)
            r_up = pltpu.roll(r, shift=te - dd, axis=0)
            v_up = pltpu.roll(val, shift=te - dd, axis=0)
            val = jnp.maximum(val, jnp.where(r_dn == r, v_dn, neg_inf))
            val = jnp.maximum(val, jnp.where(r_up == r, v_up, neg_inf))
        seg_ref[...] = val

        # ---- write one [1, Fo] row per node touched by this tile -------------
        lo = tile_lo_ref[i]
        hi = tile_hi_ref[i]
        tile_start = i * te

        def node_body(n, carry):
            start = ptr_ref[n]
            end = ptr_ref[n + 1]

            @pl.when(end > start)                      # node n has edges
            def _():
                # local index of node n's last edge inside this tile
                li = jnp.minimum(end, tile_start + te) - 1 - tile_start
                li = jnp.maximum(li, 0)
                seg_max = seg_ref[pl.ds(li, 1), :]             # [1, Fo]
                cur = agg_ref[pl.ds(n, 1), :]
                agg_ref[pl.ds(n, 1), :] = jnp.maximum(cur, seg_max)

            return carry

        lax.fori_loop(lo, hi + 1, node_body, 0)

        # ---- finalize: nodes with no incoming edge -> 0 ----------------------
        # (Note: this also maps NaN aggregates to 0, unlike a NaN-propagating
        #  PyTorch reference; harmless for finite inputs.)
        @pl.when(i == pl.num_programs(0) - 1)
        def _():
            a = agg_ref[...]
            agg_ref[...] = jnp.where(a > neg_inf, a, 0.0)

    return kernel


def edge_conv_mod(x, edge_index, w1, b1, w2, b2, *,
                  tile_edges=1024, compute_dtype=jnp.bfloat16):
    """EdgeConvMod forward. Returns (x_agg [N, Fo] f32, out [E, Fo] f32)."""
    n_nodes, f = x.shape
    row = edge_index[0].astype(jnp.int32)
    col = edge_index[1].astype(jnp.int32)
    e = int(row.shape[0])
    k = 2 * f
    h_dim = int(w1.shape[1])
    fo = int(w2.shape[1])

    # Sort edges by destination node so the in-kernel scatter is a segment max.
    perm = jnp.argsort(row)
    inv_perm = jnp.argsort(perm)
    row_s = row[perm]
    col_s = col[perm]

    # TODO(synk): move this gather+concat into the kernel (see header).
    edge_feat = jnp.concatenate([x[row_s], x[col_s]], axis=-1).astype(compute_dtype)

    # Edge-tile size: multiple of 8 sublanes; pad E up to a whole number of tiles.
    te = _round_up(max(8, min(int(tile_edges), e)), 8)
    e_pad = _round_up(e, te)
    num_tiles = e_pad // te
    pad_e = e_pad - e
    if pad_e:
        edge_feat = jnp.concatenate(
            [edge_feat, jnp.zeros((pad_e, k), compute_dtype)], axis=0)
        row_s_pad = jnp.concatenate(
            [row_s, jnp.full((pad_e,), n_nodes, jnp.int32)])
    else:
        row_s_pad = row_s

    # +1 dummy node row absorbs the padded edges; round node count to sublanes.
    n_agg = _round_up(n_nodes + 1, 8)

    rp = row_s_pad.reshape(num_tiles, te)
    tile_lo = rp[:, 0].astype(jnp.int32)       # first node touched by each tile
    tile_hi = rp[:, -1].astype(jnp.int32)      # last node touched by each tile
    row2d = row_s_pad.reshape(e_pad, 1)

    # CSR pointers over the padded, sorted edge list: ptr[n] = first edge index
    # with row >= n.  Scalar-prefetched into SMEM for the per-node writeback.
    ptr = jnp.searchsorted(
        row_s_pad, jnp.arange(n_nodes + 2, dtype=jnp.int32), side="left"
    ).astype(jnp.int32)

    # Parameters in their natural (unpadded) shapes; matmul inputs bf16, f32 acc.
    w1c = w1.astype(compute_dtype)                               # [2F, H]
    b1c = b1.reshape(1, -1).astype(jnp.float32)                  # [1, H]
    w2c = w2.astype(compute_dtype)                               # [H, Fo]
    b2c = b2.reshape(1, -1).astype(jnp.float32)                  # [1, Fo]

    kernel = _make_kernel(te, fo)

    grid_spec = pltpu.PrefetchScalarGridSpec(
        num_scalar_prefetch=3,                 # tile_lo, tile_hi, node_ptr -> SMEM
        grid=(num_tiles,),
        in_specs=[
            pl.BlockSpec((te, 1), lambda i, lo, hi, p: (i, 0)),       # sorted rows
            pl.BlockSpec((te, k), lambda i, lo, hi, p: (i, 0)),       # edge features
            pl.BlockSpec((k, h_dim), lambda i, lo, hi, p: (0, 0)),    # W1
            pl.BlockSpec((1, h_dim), lambda i, lo, hi, p: (0, 0)),    # b1
            pl.BlockSpec((h_dim, fo), lambda i, lo, hi, p: (0, 0)),   # W2
            pl.BlockSpec((1, fo), lambda i, lo, hi, p: (0, 0)),       # b2
        ],
        out_specs=[
            pl.BlockSpec((n_agg, fo), lambda i, lo, hi, p: (0, 0)),   # resident agg
            pl.BlockSpec((te, fo), lambda i, lo, hi, p: (i, 0)),      # per-edge out
        ],
        scratch_shapes=[pltpu.VMEM((te, fo), jnp.float32)],           # segment maxima
    )

    agg_pad, out_pad = pl.pallas_call(
        kernel,
        grid_spec=grid_spec,
        out_shape=(jax.ShapeDtypeStruct((n_agg, fo), jnp.float32),
                   jax.ShapeDtypeStruct((e_pad, fo), jnp.bfloat16)),
        compiler_params=pltpu.CompilerParams(
            # agg is a cross-tile max reduction -> the edge-tile axis is "arbitrary".
            dimension_semantics=("arbitrary",),
            vmem_limit_bytes=_vmem_limit_bytes(),
        ),
    )(tile_lo, tile_hi, ptr, row2d, edge_feat, w1c, b1c, w2c, b2c)

    out = out_pad[:e].astype(jnp.float32)[inv_perm]   # back to original edge order
    agg = agg_pad[:n_nodes, :]
    return agg, out


if __name__ == "__main__":
    key = jax.random.PRNGKey(0)
    k_x, k_w1, k_b1, k_w2, k_b2, k_row, k_col = jax.random.split(key, 7)

    N, F, E, H, FO = 20, 8, 64, 32, 16

    # deterministic inputs; nodes 16..19 get no edges -> exercises empty-node -> 0
    x = jax.random.normal(k_x, (N, F), dtype=jnp.float32)
    row = jax.random.randint(k_row, (E,), 0, 16, dtype=jnp.int32)
    col = jax.random.randint(k_col, (E,), 0, N, dtype=jnp.int32)
    edge_index = jnp.stack([row, col])                       # [2, E]

    # deterministic parameters for nn = Linear(2F, H) -> ReLU -> Linear(H, FO)
    w1 = jax.random.normal(k_w1, (2 * F, H), dtype=jnp.float32) * 0.1
    b1 = jax.random.normal(k_b1, (1, H), dtype=jnp.float32) * 0.1
    w2 = jax.random.normal(k_w2, (H, FO), dtype=jnp.float32) * 0.1
    b2 = jax.random.normal(k_b2, (1, FO), dtype=jnp.float32) * 0.1

    # small tile so the multi-tile / cross-tile accumulation path is exercised
    agg, out = edge_conv_mod(x, edge_index, w1, b1, w2, b2, tile_edges=32)
    jax.block_until_ready((agg, out))

    # pure-JAX f32 reference
    ef = jnp.concatenate([x[row], x[col]], axis=-1)
    out_ref = jnp.maximum(ef @ w1 + b1, 0.0) @ w2 + b2
    seg = jax.ops.segment_max(out_ref, row, num_segments=N)
    seg = jnp.where(jnp.isfinite(seg), seg, 0.0)

    assert out.shape == (E, FO) and agg.shape == (N, FO)
    # bf16 matmul inputs + bf16 out storage with f32 accumulation -> modest tolerance
    assert jnp.allclose(out, out_ref, atol=3e-2, rtol=3e-2), "edge MLP output mismatch"
    assert jnp.allclose(agg, seg, atol=3e-2, rtol=3e-2), "scatter-max aggregation mismatch"

    print("KERNEL_OK")
</pallas_src>

<mosaic_0001>
module attributes {stable_mosaic.version = 11 : i64} {
  func.func @kernel(%arg0: i32, %arg1: memref<2xi32, #tpu.memory_space<smem>>, %arg2: memref<2xi32, #tpu.memory_space<smem>>, %arg3: memref<22xi32, #tpu.memory_space<smem>>, %arg4: memref<32x1xi32, #tpu.memory_space<vmem>>, %arg5: memref<32x16xbf16, #tpu.memory_space<vmem>>, %arg6: memref<16x32xbf16, #tpu.memory_space<vmem>>, %arg7: memref<1x32xf32, #tpu.memory_space<vmem>>, %arg8: memref<32x16xbf16, #tpu.memory_space<vmem>>, %arg9: memref<1x16xf32, #tpu.memory_space<vmem>>, %arg10: memref<24x16xf32, #tpu.memory_space<vmem>>, %arg11: memref<32x16xbf16, #tpu.memory_space<vmem>>, %arg12: memref<32x16xf32, #tpu.memory_space<vmem>>) attributes {dimension_semantics = [#tpu.dimension_semantics<arbitrary>], iteration_bounds = array<i64: 2>, scalar_prefetch = 3 : i64, scratch_operands = 1 : i64, tpu.core_type = #tpu.core_type<tc>, window_params = [{transform_indices = @transform_0, window_bounds = array<i64: 32, 1>}, {transform_indices = @transform_1, window_bounds = array<i64: 32, 16>}, {pipeline_mode = #tpu.pipeline_mode<synchronous>, transform_indices = @transform_2, window_bounds = array<i64: 16, 32>}, {pipeline_mode = #tpu.pipeline_mode<synchronous>, transform_indices = @transform_3, window_bounds = array<i64: 1, 32>}, {pipeline_mode = #tpu.pipeline_mode<synchronous>, transform_indices = @transform_4, window_bounds = array<i64: 32, 16>}, {pipeline_mode = #tpu.pipeline_mode<synchronous>, transform_indices = @transform_5, window_bounds = array<i64: 1, 16>}, {pipeline_mode = #tpu.pipeline_mode<synchronous>, transform_indices = @transform_6, window_bounds = array<i64: 24, 16>}, {transform_indices = @transform_7, window_bounds = array<i64: 32, 16>}]} {
    %c0_i32 = arith.constant 0 : i32
    %0 = arith.cmpi eq, %arg0, %c0_i32 : i32
    %1 = arith.extui %0 : i1 to i32
    %c0_i32_0 = arith.constant 0 : i32
    %2 = arith.cmpi ne, %1, %c0_i32_0 : i32
    scf.if %2 {
      %cst_45 = arith.constant 0xFF800000 : f32
      %112 = vector.broadcast %cst_45 : f32 to vector<24x16xf32>
      %c0_46 = arith.constant 0 : index
      %c0_47 = arith.constant 0 : index
      %113 = vector.load %arg10[%c0_46, %c0_47] : memref<24x16xf32, #tpu.memory_space<vmem>>, vector<24x16xf32>
      tpu.vector_store %arg10[%c0_46, %c0_47], %112 {strides = array<i32>} : memref<24x16xf32, #tpu.memory_space<vmem>>, vector<24x16xf32>,
    } else {
    }
    %c0 = arith.constant 0 : index
    %c0_1 = arith.constant 0 : index
    %3 = vector.load %arg5[%c0, %c0_1] : memref<32x16xbf16, #tpu.memory_space<vmem>>, vector<32x16xbf16>
    %c0_2 = arith.constant 0 : index
    %c0_3 = arith.constant 0 : index
    %4 = vector.load %arg6[%c0_2, %c0_3] : memref<16x32xbf16, #tpu.memory_space<vmem>>, vector<16x32xbf16>
    %cst = arith.constant dense<0.000000e+00> : vector<32x32xf32>
    %5 = tpu.matmul %3, %4, %cst {dimension_numbers = #tpu.dot_dimension_numbers<[1], [0], [0], [1], [0, 0, 1, 1], [], []>} : vector<32x16xbf16>, vector<16x32xbf16>, vector<32x32xf32> -> vector<32x32xf32>
    %c0_4 = arith.constant 0 : index
    %c0_5 = arith.constant 0 : index
    %6 = vector.load %arg7[%c0_4, %c0_5] : memref<1x32xf32, #tpu.memory_space<vmem>>, vector<1x32xf32>
    %7 = vector.broadcast %6 : vector<1x32xf32> to vector<32x32xf32>
    %8 = arith.addf %5, %7 : vector<32x32xf32>
    %cst_6 = arith.constant 0.000000e+00 : f32
    %9 = vector.broadcast %cst_6 : f32 to vector<32x32xf32>
    %10 = arith.maximumf %8, %9 : vector<32x32xf32>
    %11 = arith.truncf %10 : vector<32x32xf32> to vector<32x32xbf16>
    %c0_7 = arith.constant 0 : index
    %c0_8 = arith.constant 0 : index
    %12 = vector.load %arg8[%c0_7, %c0_8] : memref<32x16xbf16, #tpu.memory_space<vmem>>, vector<32x16xbf16>
    %cst_9 = arith.constant dense<0.000000e+00> : vector<32x16xf32>
    %13 = tpu.matmul %11, %12, %cst_9 {dimension_numbers = #tpu.dot_dimension_numbers<[1], [0], [0], [1], [0, 0, 1, 1], [], []>} : vector<32x32xbf16>, vector<32x16xbf16>, vector<32x16xf32> -> vector<32x16xf32>
    %c0_10 = arith.constant 0 : index
    %c0_11 = arith.constant 0 : index
    %14 = vector.load %arg9[%c0_10, %c0_11] : memref<1x16xf32, #tpu.memory_space<vmem>>, vector<1x16xf32>
    %15 = vector.broadcast %14 : vector<1x16xf32> to vector<32x16xf32>
    %16 = arith.addf %13, %15 : vector<32x16xf32>
    %17 = arith.truncf %16 : vector<32x16xf32> to vector<32x16xbf16>
    %c0_12 = arith.constant 0 : index
    %c0_13 = arith.constant 0 : index
    %18 = vector.load %arg11[%c0_12, %c0_13] : memref<32x16xbf16, #tpu.memory_space<vmem>>, vector<32x16xbf16>
    tpu.vector_store %arg11[%c0_12, %c0_13], %17 {strides = array<i32>} : memref<32x16xbf16, #tpu.memory_space<vmem>>, vector<32x16xbf16>,
    %c0_14 = arith.constant 0 : index
    %c0_15 = arith.constant 0 : index
    %19 = vector.load %arg4[%c0_14, %c0_15] : memref<32x1xi32, #tpu.memory_space<vmem>>, vector<32x1xi32>
    %c1_i32 = arith.constant 1 : i32
    %20 = tpu.dynamic_rotate %19 by %c1_i32 dim 0 : vector<32x1xi32>, i32 -> vector<32x1xi32>
    %c1_i32_16 = arith.constant 1 : i32
    %21 = tpu.dynamic_rotate %16 by %c1_i32_16 dim 0 : vector<32x16xf32>, i32 -> vector<32x16xf32>
    %c31_i32 = arith.constant 31 : i32
    %22 = tpu.dynamic_rotate %19 by %c31_i32 dim 0 : vector<32x1xi32>, i32 -> vector<32x1xi32>
    %c31_i32_17 = arith.constant 31 : i32
    %23 = tpu.dynamic_rotate %16 by %c31_i32_17 dim 0 : vector<32x16xf32>, i32 -> vector<32x16xf32>
    %24 = arith.cmpi eq, %20, %19 : vector<32x1xi32>
    %cst_18 = arith.constant 0xFF800000 : f32
    %25 = vector.shape_cast %24 : vector<32x1xi1> to vector<32x1xi1>
    %26 = vector.broadcast %25 : vector<32x1xi1> to vector<32x16xi1>
    %27 = vector.broadcast %cst_18 : f32 to vector<32x16xf32>
    %28 = arith.select %26, %21, %27 : vector<32x16xi1>, vector<32x16xf32>
    %29 = arith.maximumf %16, %28 : vector<32x16xf32>
    %30 = arith.cmpi eq, %22, %19 : vector<32x1xi32>
    %cst_19 = arith.constant 0xFF800000 : f32
    %31 = vector.shape_cast %30 : vector<32x1xi1> to vector<32x1xi1>
    %32 = vector.broadcast %31 : vector<32x1xi1> to vector<32x16xi1>
    %33 = vector.broadcast %cst_19 : f32 to vector<32x16xf32>
    %34 = arith.select %32, %23, %33 : vector<32x16xi1>, vector<32x16xf32>
    %35 = arith.maximumf %29, %34 : vector<32x16xf32>
    %c2_i32 = arith.constant 2 : i32
    %36 = tpu.dynamic_rotate %19 by %c2_i32 dim 0 : vector<32x1xi32>, i32 -> vector<32x1xi32>
    %c2_i32_20 = arith.constant 2 : i32
    %37 = tpu.dynamic_rotate %35 by %c2_i32_20 dim 0 : vector<32x16xf32>, i32 -> vector<32x16xf32>
    %c30_i32 = arith.constant 30 : i32
    %38 = tpu.dynamic_rotate %19 by %c30_i32 dim 0 : vector<32x1xi32>, i32 -> vector<32x1xi32>
    %c30_i32_21 = arith.constant 30 : i32
    %39 = tpu.dynamic_rotate %35 by %c30_i32_21 dim 0 : vector<32x16xf32>, i32 -> vector<32x16xf32>
    %40 = arith.cmpi eq, %36, %19 : vector<32x1xi32>
    %cst_22 = arith.constant 0xFF800000 : f32
    %41 = vector.shape_cast %40 : vector<32x1xi1> to vector<32x1xi1>
    %42 = vector.broadcast %41 : vector<32x1xi1> to vector<32x16xi1>
    %43 = vector.broadcast %cst_22 : f32 to vector<32x16xf32>
    %44 = arith.select %42, %37, %43 : vector<32x16xi1>, vector<32x16xf32>
    %45 = arith.maximumf %35, %44 : vector<32x16xf32>
    %46 = arith.cmpi eq, %38, %19 : vector<32x1xi32>
    %cst_23 = arith.constant 0xFF800000 : f32
    %47 = vector.shape_cast %46 : vector<32x1xi1> to vector<32x1xi1>
    %48 = vector.broadcast %47 : vector<32x1xi1> to vector<32x16xi1>
    %49 = vector.broadcast %cst_23 : f32 to vector<32x16xf32>
    %50 = arith.select %48, %39, %49 : vector<32x16xi1>, vector<32x16xf32>
    %51 = arith.maximumf %45, %50 : vector<32x16xf32>
    %c4_i32 = arith.constant 4 : i32
    %52 = tpu.dynamic_rotate %19 by %c4_i32 dim 0 : vector<32x1xi32>, i32 -> vector<32x1xi32>
    %c4_i32_24 = arith.constant 4 : i32
    %53 = tpu.dynamic_rotate %51 by %c4_i32_24 dim 0 : vector<32x16xf32>, i32 -> vector<32x16xf32>
    %c28_i32 = arith.constant 28 : i32
    %54 = tpu.dynamic_rotate %19 by %c28_i32 dim 0 : vector<32x1xi32>, i32 -> vector<32x1xi32>
    %c28_i32_25 = arith.constant 28 : i32
    %55 = tpu.dynamic_rotate %51 by %c28_i32_25 dim 0 : vector<32x16xf32>, i32 -> vector<32x16xf32>
    %56 = arith.cmpi eq, %52, %19 : vector<32x1xi32>
    %cst_26 = arith.constant 0xFF800000 : f32
    %57 = vector.shape_cast %56 : vector<32x1xi1> to vector<32x1xi1>
    %58 = vector.broadcast %57 : vector<32x1xi1> to vector<32x16xi1>
    %59 = vector.broadcast %cst_26 : f32 to vector<32x16xf32>
    %60 = arith.select %58, %53, %59 : vector<32x16xi1>, vector<32x16xf32>
    %61 = arith.maximumf %51, %60 : vector<32x16xf32>
    %62 = arith.cmpi eq, %54, %19 : vector<32x1xi32>
    %cst_27 = arith.constant 0xFF800000 : f32
    %63 = vector.shape_cast %62 : vector<32x1xi1> to vector<32x1xi1>
    %64 = vector.broadcast %63 : vector<32x1xi1> to vector<32x16xi1>
    %65 = vector.broadcast %cst_27 : f32 to vector<32x16xf32>
    %66 = arith.select %64, %55, %65 : vector<32x16xi1>, vector<32x16xf32>
    %67 = arith.maximumf %61, %66 : vector<32x16xf32>
    %c8_i32 = arith.constant 8 : i32
    %68 = tpu.dynamic_rotate %19 by %c8_i32 dim 0 : vector<32x1xi32>, i32 -> vector<32x1xi32>
    %c8_i32_28 = arith.constant 8 : i32
    %69 = tpu.dynamic_rotate %67 by %c8_i32_28 dim 0 : vector<32x16xf32>, i32 -> vector<32x16xf32>
    %c24_i32 = arith.constant 24 : i32
    %70 = tpu.dynamic_rotate %19 by %c24_i32 dim 0 : vector<32x1xi32>, i32 -> vector<32x1xi32>
    %c24_i32_29 = arith.constant 24 : i32
    %71 = tpu.dynamic_rotate %67 by %c24_i32_29 dim 0 : vector<32x16xf32>, i32 -> vector<32x16xf32>
    %72 = arith.cmpi eq, %68, %19 : vector<32x1xi32>
    %cst_30 = arith.constant 0xFF800000 : f32
    %73 = vector.shape_cast %72 : vector<32x1xi1> to vector<32x1xi1>
    %74 = vector.broadcast %73 : vector<32x1xi1> to vector<32x16xi1>
    %75 = vector.broadcast %cst_30 : f32 to vector<32x16xf32>
    %76 = arith.select %74, %69, %75 : vector<32x16xi1>, vector<32x16xf32>
    %77 = arith.maximumf %67, %76 : vector<32x16xf32>
    %78 = arith.cmpi eq, %70, %19 : vector<32x1xi32>
    %cst_31 = arith.constant 0xFF800000 : f32
    %79 = vector.shape_cast %78 : vector<32x1xi1> to vector<32x1xi1>
    %80 = vector.broadcast %79 : vector<32x1xi1> to vector<32x16xi1>
    %81 = vector.broadcast %cst_31 : f32 to vector<32x16xf32>
    %82 = arith.select %80, %71, %81 : vector<32x16xi1>, vector<32x16xf32>
    %83 = arith.maximumf %77, %82 : vector<32x16xf32>
    %c16_i32 = arith.constant 16 : i32
    %84 = tpu.dynamic_rotate %19 by %c16_i32 dim 0 : vector<32x1xi32>, i32 -> vector<32x1xi32>
    %c16_i32_32 = arith.constant 16 : i32
    %85 = tpu.dynamic_rotate %83 by %c16_i32_32 dim 0 : vector<32x16xf32>, i32 -> vector<32x16xf32>
    %c16_i32_33 = arith.constant 16 : i32
    %86 = tpu.dynamic_rotate %19 by %c16_i32_33 dim 0 : vector<32x1xi32>, i32 -> vector<32x1xi32>
    %c16_i32_34 = arith.constant 16 : i32
    %87 = tpu.dynamic_rotate %83 by %c16_i32_34 dim 0 : vector<32x16xf32>, i32 -> vector<32x16xf32>
    %88 = arith.cmpi eq, %84, %19 : vector<32x1xi32>
    %cst_35 = arith.constant 0xFF800000 : f32
    %89 = vector.shape_cast %88 : vector<32x1xi1> to vector<32x1xi1>
    %90 = vector.broadcast %89 : vector<32x1xi1> to vector<32x16xi1>
    %91 = vector.broadcast %cst_35 : f32 to vector<32x16xf32>
    %92 = arith.select %90, %85, %91 : vector<32x16xi1>, vector<32x16xf32>
    %93 = arith.maximumf %83, %92 : vector<32x16xf32>
    %94 = arith.cmpi eq, %86, %19 : vector<32x1xi32>
    %cst_36 = arith.constant 0xFF800000 : f32
    %95 = vector.shape_cast %94 : vector<32x1xi1> to vector<32x1xi1>
    %96 = vector.broadcast %95 : vector<32x1xi1> to vector<32x16xi1>
    %97 = vector.broadcast %cst_36 : f32 to vector<32x16xf32>
    %98 = arith.select %96, %87, %97 : vector<32x16xi1>, vector<32x16xf32>
    %99 = arith.maximumf %93, %98 : vector<32x16xf32>
    %c0_37 = arith.constant 0 : index
    %c0_38 = arith.constant 0 : index
    %100 = vector.load %arg12[%c0_37, %c0_38] : memref<32x16xf32, #tpu.memory_space<vmem>>, vector<32x16xf32>
    tpu.vector_store %arg12[%c0_37, %c0_38], %99 {strides = array<i32>} : memref<32x16xf32, #tpu.memory_space<vmem>>, vector<32x16xf32>,
    %101 = arith.index_cast %arg0 : i32 to index
    %102 = memref.load %arg1[%101] : memref<2xi32, #tpu.memory_space<smem>>
    %103 = arith.index_cast %arg0 : i32 to index
    %104 = memref.load %arg2[%103] : memref<2xi32, #tpu.memory_space<smem>>
    %c32_i32 = arith.constant 32 : i32
    %105 = arith.muli %arg0, %c32_i32 : i32
    %c1_i32_39 = arith.constant 1 : i32
    %106 = arith.addi %104, %c1_i32_39 : i32
    %c0_i32_40 = arith.constant 0 : i32
    %107 = arith.subi %106, %102 : i32
    %108 = arith.addi %102, %107 : i32
    %c1_i32_41 = arith.constant 1 : i32
    scf.for %arg13 = %102 to %108 step %c1_i32_41  : i32 {
      %112 = arith.index_cast %arg13 : i32 to index
      %113 = memref.load %arg3[%112] : memref<22xi32, #tpu.memory_space<smem>>
      %c1_i32_45 = arith.constant 1 : i32
      %114 = arith.addi %arg13, %c1_i32_45 : i32
      %115 = arith.index_cast %114 : i32 to index
      %116 = memref.load %arg3[%115] : memref<22xi32, #tpu.memory_space<smem>>
      %117 = arith.cmpi sgt, %116, %113 : i32
      %118 = arith.extui %117 : i1 to i32
      %c0_i32_46 = arith.constant 0 : i32
      %119 = arith.cmpi ne, %118, %c0_i32_46 : i32
      scf.if %119 {
        %c32_i32_47 = arith.constant 32 : i32
        %120 = arith.addi %105, %c32_i32_47 : i32
        %121 = arith.minsi %116, %120 : i32
        %c1_i32_48 = arith.constant 1 : i32
        %122 = arith.subi %121, %c1_i32_48 : i32
        %123 = arith.subi %122, %105 : i32
        %c0_i32_49 = arith.constant 0 : i32
        %124 = arith.maxsi %123, %c0_i32_49 : i32
        %125 = arith.index_cast %124 : i32 to index
        %c0_50 = arith.constant 0 : index
        %126 = vector.load %arg12[%125, %c0_50] : memref<32x16xf32, #tpu.memory_space<vmem>>, vector<1x16xf32>
        %127 = arith.index_cast %arg13 : i32 to index
        %c0_51 = arith.constant 0 : index
        %128 = vector.load %arg10[%127, %c0_51] : memref<24x16xf32, #tpu.memory_space<vmem>>, vector<1x16xf32>
        %129 = arith.maximumf %128, %126 : vector<1x16xf32>
        %130 = arith.index_cast %arg13 : i32 to index
        %c0_52 = arith.constant 0 : index
        %131 = vector.load %arg10[%130, %c0_52] : memref<24x16xf32, #tpu.memory_space<vmem>>, vector<1x16xf32>
        tpu.vector_store %arg10[%130, %c0_52], %129 {strides = array<i32>} : memref<24x16xf32, #tpu.memory_space<vmem>>, vector<1x16xf32>,
      } else {
      }
    }
    %c1_i32_42 = arith.constant 1 : i32
    %109 = arith.cmpi eq, %arg0, %c1_i32_42 : i32
    %110 = arith.extui %109 : i1 to i32
    %cst_43 = arith.constant 0xFF800000 : f32
    %c0_i32_44 = arith.constant 0 : i32
    %111 = arith.cmpi ne, %110, %c0_i32_44 : i32
    scf.if %111 {
      %c0_45 = arith.constant 0 : index
      %c0_46 = arith.constant 0 : index
      %112 = vector.load %arg10[%c0_45, %c0_46] : memref<24x16xf32, #tpu.memory_space<vmem>>, vector<24x16xf32>
      %113 = vector.broadcast %cst_43 : f32 to vector<24x16xf32>
      %114 = arith.cmpf ogt, %112, %113 : vector<24x16xf32>
      %cst_47 = arith.constant 0.000000e+00 : f32
      %115 = vector.broadcast %cst_47 : f32 to vector<24x16xf32>
      %116 = arith.select %114, %112, %115 : vector<24x16xi1>, vector<24x16xf32>
      %c0_48 = arith.constant 0 : index
      %c0_49 = arith.constant 0 : index
      %117 = vector.load %arg10[%c0_48, %c0_49] : memref<24x16xf32, #tpu.memory_space<vmem>>, vector<24x16xf32>
      tpu.vector_store %arg10[%c0_48, %c0_49], %116 {strides = array<i32>} : memref<24x16xf32, #tpu.memory_space<vmem>>, vector<24x16xf32>,
    } else {
    }
    return
  }
  func.func @transform_0(%arg0: i32, %arg1: memref<2xi32, #tpu.memory_space<smem>>, %arg2: memref<2xi32, #tpu.memory_space<smem>>, %arg3: memref<22xi32, #tpu.memory_space<smem>>) -> (i32, i32) {
    %c0_i32 = arith.constant 0 : i32
    %c0_i32_0 = arith.constant 0 : i32
    return %arg0, %c0_i32 : i32, i32
  }
  func.func @transform_1(%arg0: i32, %arg1: memref<2xi32, #tpu.memory_space<smem>>, %arg2: memref<2xi32, #tpu.memory_space<smem>>, %arg3: memref<22xi32, #tpu.memory_space<smem>>) -> (i32, i32) {
    %c0_i32 = arith.constant 0 : i32
    %c0_i32_0 = arith.constant 0 : i32
    return %arg0, %c0_i32 : i32, i32
  }
  func.func @transform_2(%arg0: i32, %arg1: memref<2xi32, #tpu.memory_space<smem>>, %arg2: memref<2xi32, #tpu.memory_space<smem>>, %arg3: memref<22xi32, #tpu.memory_space<smem>>) -> (i32, i32) {
    %c0_i32 = arith.constant 0 : i32
    %c0_i32_0 = arith.constant 0 : i32
    %c0_i32_1 = arith.constant 0 : i32
    return %c0_i32, %c0_i32_0 : i32, i32
  }
  func.func @transform_3(%arg0: i32, %arg1: memref<2xi32, #tpu.memory_space<smem>>, %arg2: memref<2xi32, #tpu.memory_space<smem>>, %arg3: memref<22xi32, #tpu.memory_space<smem>>) -> (i32, i32) {
    %c0_i32 = arith.constant 0 : i32
    %c0_i32_0 = arith.constant 0 : i32
    %c0_i32_1 = arith.constant 0 : i32
    return %c0_i32, %c0_i32_0 : i32, i32
  }
  func.func @transform_4(%arg0: i32, %arg1: memref<2xi32, #tpu.memory_space<smem>>, %arg2: memref<2xi32, #tpu.memory_space<smem>>, %arg3: memref<22xi32, #tpu.memory_space<smem>>) -> (i32, i32) {
    %c0_i32 = arith.constant 0 : i32
    %c0_i32_0 = arith.constant 0 : i32
    %c0_i32_1 = arith.constant 0 : i32
    return %c0_i32, %c0_i32_0 : i32, i32
  }
  func.func @transform_5(%arg0: i32, %arg1: memref<2xi32, #tpu.memory_space<smem>>, %arg2: memref<2xi32, #tpu.memory_space<smem>>, %arg3: memref<22xi32, #tpu.memory_space<smem>>) -> (i32, i32) {
    %c0_i32 = arith.constant 0 : i32
    %c0_i32_0 = arith.constant 0 : i32
    %c0_i32_1 = arith.constant 0 : i32
    return %c0_i32, %c0_i32_0 : i32, i32
  }
  func.func @transform_6(%arg0: i32, %arg1: memref<2xi32, #tpu.memory_space<smem>>, %arg2: memref<2xi32, #tpu.memory_space<smem>>, %arg3: memref<22xi32, #tpu.memory_space<smem>>) -> (i32, i32) {
    %c0_i32 = arith.constant 0 : i32
    %c0_i32_0 = arith.constant 0 : i32
    %c0_i32_1 = arith.constant 0 : i32
    return %c0_i32, %c0_i32_0 : i32, i32
  }
  func.func @transform_7(%arg0: i32, %arg1: memref<2xi32, #tpu.memory_space<smem>>, %arg2: memref<2xi32, #tpu.memory_space<smem>>, %arg3: memref<22xi32, #tpu.memory_space<smem>>) -> (i32, i32) {
    %c0_i32 = arith.constant 0 : i32
    %c0_i32_0 = arith.constant 0 : i32
    return %arg0, %c0_i32 : i32, i32
  }
}

</mosaic_0001>

<llo_original>
// kernel: tpu_custom_call.1
$region0: #{tpu_custom_call.1}
  #allocation0 [shape = 'u32[]', space=smem, size = 0x4, offset = 0x4, fixed_abs, tag = 'smem constant byte address 0x4 - core index']
  #allocation1 [shape = 'u32[144,128]{1,0:T(1,128)}', space=vmem, size = 0x12000, scoped, tag = 'internal scratch']
  #allocation2 [shape = 'f32[32,16]{1,0:T(8,128)}', space=vmem, size = 0x4000, scoped, tag = 'scratch operand']
  #allocation3 [shape = 's32[1]{0}', space=sflag, size = 0x4, scoped, tag = 'scoped memory for tpu_custom_call.1']
  #allocation4 [shape = 'u8[512]{0}', space=smem, size = 0x200, scoped, tag = 'prefetched SMEM operand 0']
  #allocation5 [shape = 'u8[512]{0}', space=smem, size = 0x200, scoped, tag = 'prefetched SMEM operand 1']
  #allocation6 [shape = 'u8[512]{0}', space=smem, size = 0x200, scoped, tag = 'prefetched SMEM operand 2']
  %s0 = inlined_call_operand.vmem [shape: s32[2], index: 0, kind: input, shape index: {}]
  %s1 = inlined_call_operand.vmem [shape: s32[2], index: 1, kind: input, shape index: {}]
  %s2 = inlined_call_operand.vmem [shape: s32[22], index: 2, kind: input, shape index: {}]
  %s3 = inlined_call_operand.vmem [shape: s32[64,1], index: 3, kind: input, shape index: {}]
  %s4 = inlined_call_operand.vmem [shape: bf16[64,16], index: 4, kind: input, shape index: {}]
  %s5 = inlined_call_operand.vmem [shape: bf16[16,32], index: 5, kind: input, shape index: {}]
  %s6 = inlined_call_operand.vmem [shape: f32[1,32], index: 6, kind: input, shape index: {}]
  %s7 = inlined_call_operand.vmem [shape: bf16[32,16], index: 7, kind: input, shape index: {}]
  %s8 = inlined_call_operand.vmem [shape: f32[1,16], index: 8, kind: input, shape index: {}]
  %s9 = inlined_call_operand.vmem [shape: f32[24,16], index: 9, kind: output, shape index: {0}]
  %s10 = inlined_call_operand.vmem [shape: bf16[64,16], index: 10, kind: output, shape index: {1}]
  %11 = xla_tuple %s9, %s10
  %s12 = sld [smem:[#allocation0]]
  $region84: #{tpu_custom_call.1} parent=0
    _
  %s14 = ssub.s32 1, %s12
  %s15 = scalar_select 0, %s14, %s12
  %s16 = sshll.u32 %s0, 4
  %s17 = int_to_ptr.vmem [resolvable:$true] %s16
  %19 = dma.vmem_to_smem %s17, 16, [#allocation4], [#allocation3]
  %s20 = sshll.u32 %s1, 4
  %s21 = int_to_ptr.vmem [resolvable:$true] %s20
  %23 = dma.vmem_to_smem %s21, 16, [#allocation5], [#allocation3]
  %s24 = sshll.u32 %s2, 4
  %s25 = int_to_ptr.vmem [resolvable:$true] %s24
  %27 = dma.vmem_to_smem %s25, 16, [#allocation6], [#allocation3]
  %28 = dma.done [#allocation3], 48
  %29 = sfence
  loop: start=0, step=1, limit=4
  $region2: #{tpu_custom_call.1} parent=0 // loop_pre_header
    _
  $region3: #{tpu_custom_call.1} parent=0 // loop_header
    %s31 = sphi 0, %s35
    %p32 = scmp.ge.s32.totalorder %s31, 4
    %s41 = sphi 0, %s43
    %s44 = sphi 0, %s41
    %s45 = sphi 0, %s44
    %s61 = sphi 0, %s45
    %s67 = sphi 0, %s69
    %s70 = sphi 0, %s67
    %s71 = sphi 0, %s70
    %s87 = sphi 0, %s71
    %s91 = sphi 0, %s91
    %s93 = sphi 0, %s91
    %s94 = sphi 0, %s93
    %s108 = sphi 0, %s94
    %s112 = sphi 0, %s112
    %s114 = sphi 0, %s112
    %s115 = sphi 0, %s114
    %s129 = sphi 0, %s115
    %s133 = sphi 0, %s133
    %s135 = sphi 0, %s133
    %s136 = sphi 0, %s135
    %s150 = sphi 0, %s136
    %s154 = sphi 0, %s154
    %s156 = sphi 0, %s154
    %s157 = sphi 0, %s156
    %s171 = sphi 0, %s157
    %s175 = sphi 0, %s175
    %s177 = sphi 0, %s175
    %s178 = sphi 0, %s177
    %s192 = sphi 0, %s178
    %s198 = sphi 0, %s200
    %s201 = sphi 0, %s198
    %s202 = sphi 0, %s201
    %s218 = sphi 0, %s202
  $region4: #{tpu_custom_call.1} parent=0 // loop_header_branch
    %34 = sbr.rel (%p32) target = $region8
  $region5: #{tpu_custom_call.1} parent=0 // loop_body
    %s36 = ssub.s32 %s31, 1
    %s37 = ssub.s32 %s31, 2
    %s38 = sadd.s32 %s31, 1
    %s39 = ssub.s32 %s31, %s38
    %p40 = scmp.eq.s32.totalorder %s39, 0
    %s42 = sadd.s32 %s41, 1
    %s43 = scalar_select %p40, %s41, %s42
    %p46 = pneg %p40
    %p47 = scmp.eq.s32.totalorder %s31, 1
    %p48 = por %p46, %p47
    %p49 = scmp.ne.s32.totalorder %s41, %s44
    %p50 = scmp.eq.s32.totalorder %s31, 0
    %p51 = por %p49, %p50
    %p52 = scmp.ne.s32.totalorder %s41, %s44
    %p53 = scmp.eq.s32.totalorder %s36, 1
    %p54 = por %p52, %p53
    %p55 = scmp.ne.s32.totalorder %s44, %s45
    %p56 = scmp.eq.s32.totalorder %s36, 0
    %p57 = por %p55, %p56
    %p58 = scmp.ne.s32.totalorder %s44, %s45
    %p59 = scmp.eq.s32.totalorder %s37, 1
    %p60 = por %p58, %p59
    %p62 = scmp.ne.s32.totalorder %s45, %s61
    %p63 = scmp.eq.s32.totalorder %s37, 0
    %p64 = por %p62, %p63
    %s65 = ssub.s32 %s31, %s38
    %p66 = scmp.eq.s32.totalorder %s65, 0
    %s68 = sadd.s32 %s67, 1
    %s69 = scalar_select %p66, %s67, %s68
    %p72 = pneg %p66
    %p73 = scmp.eq.s32.totalorder %s31, 1
    %p74 = por %p72, %p73
    %p75 = scmp.ne.s32.totalorder %s67, %s70
    %p76 = scmp.eq.s32.totalorder %s31, 0
    %p77 = por %p75, %p76
    %p78 = scmp.ne.s32.totalorder %s67, %s70
    %p79 = scmp.eq.s32.totalorder %s36, 1
    %p80 = por %p78, %p79
    %p81 = scmp.ne.s32.totalorder %s70, %s71
    %p82 = scmp.eq.s32.totalorder %s36, 0
    %p83 = por %p81, %p82
    %p84 = scmp.ne.s32.totalorder %s70, %s71
    %p85 = scmp.eq.s32.totalorder %s37, 1
    %p86 = por %p84, %p85
    %p88 = scmp.ne.s32.totalorder %s71, %s87
    %p89 = scmp.eq.s32.totalorder %s37, 0
    %p90 = por %p88, %p89
    %s92 = sadd.s32 %s91, 1
    %p95 = scmp.eq.s32.totalorder %s31, 1
    %p96 = scmp.ne.s32.totalorder %s91, %s93
    %p97 = scmp.eq.s32.totalorder %s31, 0
    %p98 = por %p96, %p97
    %p99 = scmp.ne.s32.totalorder %s91, %s93
    %p100 = scmp.eq.s32.totalorder %s36, 1
    %p101 = por %p99, %p100
    %p102 = scmp.ne.s32.totalorder %s93, %s94
    %p103 = scmp.eq.s32.totalorder %s36, 0
    %p104 = por %p102, %p103
    %p105 = scmp.ne.s32.totalorder %s93, %s94
    %p106 = scmp.eq.s32.totalorder %s37, 1
    %p107 = por %p105, %p106
    %p109 = scmp.ne.s32.totalorder %s94, %s108
    %p110 = scmp.eq.s32.totalorder %s37, 0
    %p111 = por %p109, %p110
    %s113 = sadd.s32 %s112, 1
    %p116 = scmp.eq.s32.totalorder %s31, 1
    %p117 = scmp.ne.s32.totalorder %s112, %s114
    %p118 = scmp.eq.s32.totalorder %s31, 0
    %p119 = por %p117, %p118
    %p120 = scmp.ne.s32.totalorder %s112, %s114
    %p121 = scmp.eq.s32.totalorder %s36, 1
    %p122 = por %p120, %p121
    %p123 = scmp.ne.s32.totalorder %s114, %s115
    %p124 = scmp.eq.s32.totalorder %s36, 0
    %p125 = por %p123, %p124
    %p126 = scmp.ne.s32.totalorder %s114, %s115
    %p127 = scmp.eq.s32.totalorder %s37, 1
    %p128 = por %p126, %p127
    %p130 = scmp.ne.s32.totalorder %s115, %s129
    %p131 = scmp.eq.s32.totalorder %s37, 0
    %p132 = por %p130, %p131
    %s134 = sadd.s32 %s133, 1
    %p137 = scmp.eq.s32.totalorder %s31, 1
    %p138 = scmp.ne.s32.totalorder %s133, %s135
    %p139 = scmp.eq.s32.totalorder %s31, 0
    %p140 = por %p138, %p139
    %p141 = scmp.ne.s32.totalorder %s133, %s135
    %p142 = scmp.eq.s32.totalorder %s36, 1
    %p143 = por %p141, %p142
    %p144 = scmp.ne.s32.totalorder %s135, %s136
    %p145 = scmp.eq.s32.totalorder %s36, 0
    %p146 = por %p144, %p145
    %p147 = scmp.ne.s32.totalorder %s135, %s136
    %p148 = scmp.eq.s32.totalorder %s37, 1
    %p149 = por %p147, %p148
    %p151 = scmp.ne.s32.totalorder %s136, %s150
    %p152 = scmp.eq.s32.totalorder %s37, 0
    %p153 = por %p151, %p152
    %s155 = sadd.s32 %s154, 1
    %p158 = scmp.eq.s32.totalorder %s31, 1
    %p159 = scmp.ne.s32.totalorder %s154, %s156
    %p160 = scmp.eq.s32.totalorder %s31, 0
    %p161 = por %p159, %p160
    %p162 = scmp.ne.s32.totalorder %s154, %s156
    %p163 = scmp.eq.s32.totalorder %s36, 1
    %p164 = por %p162, %p163
    %p165 = scmp.ne.s32.totalorder %s156, %s157
    %p166 = scmp.eq.s32.totalorder %s36, 0
    %p167 = por %p165, %p166
    %p168 = scmp.ne.s32.totalorder %s156, %s157
    %p169 = scmp.eq.s32.totalorder %s37, 1
    %p170 = por %p168, %p169
    %p172 = scmp.ne.s32.totalorder %s157, %s171
    %p173 = scmp.eq.s32.totalorder %s37, 0
    %p174 = por %p172, %p173
    %s176 = sadd.s32 %s175, 1
    %p179 = scmp.eq.s32.totalorder %s31, 1
    %p180 = scmp.ne.s32.totalorder %s175, %s177
    %p181 = scmp.eq.s32.totalorder %s31, 0
    %p182 = por %p180, %p181
    %p183 = scmp.ne.s32.totalorder %s175, %s177
    %p184 = scmp.eq.s32.totalorder %s36, 1
    %p185 = por %p183, %p184
    %p186 = scmp.ne.s32.totalorder %s177, %s178
    %p187 = scmp.eq.s32.totalorder %s36, 0
    %p188 = por %p186, %p187
    %p189 = scmp.ne.s32.totalorder %s177, %s178
    %p190 = scmp.eq.s32.totalorder %s37, 1
    %p191 = por %p189, %p190
    %p193 = scmp.ne.s32.totalorder %s178, %s192
    %p194 = scmp.eq.s32.totalorder %s37, 0
    %p195 = por %p193, %p194
    %s196 = ssub.s32 %s31, %s38
    %p197 = scmp.eq.s32.totalorder %s196, 0
    %s199 = sadd.s32 %s198, 1
    %s200 = scalar_select %p197, %s198, %s199
    %p203 = pneg %p197
    %p204 = scmp.eq.s32.totalorder %s31, 1
    %p205 = por %p203, %p204
    %p206 = scmp.ne.s32.totalorder %s198, %s201
    %p207 = scmp.eq.s32.totalorder %s31, 0
    %p208 = por %p206, %p207
    %p209 = scmp.ne.s32.totalorder %s198, %s201
    %p210 = scmp.eq.s32.totalorder %s36, 1
    %p211 = por %p209, %p210
    %p212 = scmp.ne.s32.totalorder %s201, %s202
    %p213 = scmp.eq.s32.totalorder %s36, 0
    %p214 = por %p212, %p213
    %p215 = scmp.ne.s32.totalorder %s201, %s202
    %p216 = scmp.eq.s32.totalorder %s37, 1
    %p217 = por %p215, %p216
    %p219 = scmp.ne.s32.totalorder %s202, %s218
    %p220 = scmp.eq.s32.totalorder %s37, 0
    %p221 = por %p219, %p220
    %p222 = scmp.le.s32.totalorder 1, %s31
    %p223 = scmp.lt.s32.totalorder %s31, 3
    %p224 = pnand %p222, %p223
    %p225 = pneg %p224
    // Predicated region
    $region9: #{tpu_custom_call.1} parent=5 // pred_check
      _
    $region10: #{tpu_custom_call.1} parent=5 // pred_check_branch
      %227 = sbr.rel (%p224) target = $region12
    $region11: #{tpu_custom_call.1} parent=5 // pred_region
      %s228 = ssub.s32 %s31, 1
      // Predicated region
      $region13: #{tpu_custom_call.1} parent=11 // pred_check
        %p229 = pneg %p104
      $region14: #{tpu_custom_call.1} parent=11 // pred_check_branch
        %231 = sbr.rel (%p229) target = $region16
      $region15: #{tpu_custom_call.1} parent=11 // pred_region
        _
      $region16: #{tpu_custom_call.1} parent=11 // pred_fallthru
        _
      // Predicated region
      $region17: #{tpu_custom_call.1} parent=11 // pred_check
        %p232 = pneg %p125
      $region18: #{tpu_custom_call.1} parent=11 // pred_check_branch
        %234 = sbr.rel (%p232) target = $region20
      $region19: #{tpu_custom_call.1} parent=11 // pred_region
        _
      $region20: #{tpu_custom_call.1} parent=11 // pred_fallthru
        _
      // Predicated region
      $region21: #{tpu_custom_call.1} parent=11 // pred_check
        %p235 = pneg %p146
      $region22: #{tpu_custom_call.1} parent=11 // pred_check_branch
        %237 = sbr.rel (%p235) target = $region24
      $region23: #{tpu_custom_call.1} parent=11 // pred_region
        _
      $region24: #{tpu_custom_call.1} parent=11 // pred_fallthru
        _
      // Predicated region
      $region25: #{tpu_custom_call.1} parent=11 // pred_check
        %p238 = pneg %p167
      $region26: #{tpu_custom_call.1} parent=11 // pred_check_branch
        %240 = sbr.rel (%p238) target = $region28
      $region27: #{tpu_custom_call.1} parent=11 // pred_region
        _
      $region28: #{tpu_custom_call.1} parent=11 // pred_fallthru
        _
    $region12: #{tpu_custom_call.1} parent=5 // pred_fallthru
      _
    %p241 = scmp.lt.s32.totalorder %s31, 2
    // Predicated region
    $region29: #{tpu_custom_call.1} parent=5 // pred_check
      %p242 = pneg %p241
    $region30: #{tpu_custom_call.1} parent=5 // pred_check_branch
      %244 = sbr.rel (%p242) target = $region32
    $region31: #{tpu_custom_call.1} parent=5 // pred_region
      // Predicated region
      $region33: #{tpu_custom_call.1} parent=31 // pred_check
        %p245 = pneg %p51
      $region34: #{tpu_custom_call.1} parent=31 // pred_check_branch
        %247 = sbr.rel (%p245) target = $region36
      $region35: #{tpu_custom_call.1} parent=31 // pred_region
        %s248 = smul.u32 4, %s31
        %p249 = scmp.lt.s32.totalorder %s248, 7
        %s250 = scalar_select %p249, %s248, 7
        %s251 = smul.addr %s250, 8
        %s252 = scalar_lea.vmem %s3, %s251
        %s253 = smul.u32 4, %s31
      $region36: #{tpu_custom_call.1} parent=31 // pred_fallthru
        _
      // Predicated region
      $region37: #{tpu_custom_call.1} parent=31 // pred_check
        %p254 = pneg %p77
      $region38: #{tpu_custom_call.1} parent=31 // pred_check_branch
        %256 = sbr.rel (%p254) target = $region40
      $region39: #{tpu_custom_call.1} parent=31 // pred_region
        %s257 = smul.u32 4, %s31
        %p258 = scmp.lt.s32.totalorder %s257, 7
        %s259 = scalar_select %p258, %s257, 7
        %s260 = smul.addr %s259, 4
        %s261 = scalar_lea.vmem %s4, %s260
        %s262 = smul.u32 4, %s31
      $region40: #{tpu_custom_call.1} parent=31 // pred_fallthru
        _
    $region32: #{tpu_custom_call.1} parent=5 // pred_fallthru
      _
    %p263 = scmp.le.s32.totalorder 1, %s31
    %p264 = scmp.lt.s32.totalorder %s31, 3
    %p265 = pnand %p263, %p264
    %p266 = pneg %p265
    // Predicated region
    $region41: #{tpu_custom_call.1} parent=5 // pred_check
      _
    $region42: #{tpu_custom_call.1} parent=5 // pred_check_branch
      %268 = sbr.rel (%p265) target = $region44
    $region43: #{tpu_custom_call.1} parent=5 // pred_region
      %s269 = ssub.s32 %s31, 1
      %s270 = smul.u32 4, %s36
      %p271 = scmp.lt.s32.totalorder %s270, 7
      %s272 = scalar_select %p271, %s270, 7
      %s273 = smul.addr %s272, 8
      %s274 = scalar_lea.vmem %s3, %s273
      %p275 = pneg %p57
      %p276 = pneg %p54
      %s277 = smul.u32 4, %s36
      %p278 = scmp.lt.s32.totalorder %s277, 7
      %s279 = scalar_select %p278, %s277, 7
      %s280 = smul.addr %s279, 4
      %s281 = scalar_lea.vmem %s4, %s280
      %p282 = pneg %p83
      %p283 = pneg %p80
      %p284 = pneg %p104
      %p285 = pneg %p101
      %p286 = pneg %p125
      %p287 = pneg %p122
      %p288 = pneg %p146
      %p289 = pneg %p143
      %p290 = pneg %p167
      %p291 = pneg %p164
      %p292 = pneg %p188
      %p293 = pneg %p185
      %p294 = pneg %p214
      %p295 = pneg %p211
      %s296 = smul.u32 4, %s36
      %p297 = scmp.lt.s32.totalorder %s296, 7
      %s298 = scalar_select %p297, %s296, 7
      %s299 = smul.addr %s298, 4
      %s300 = scalar_lea.vmem %s10, %s299
      %s301 = smul.u32 4, %s36
      %p302 = scmp.lt.s32.totalorder %s301, 7
      %s303 = scalar_select %p302, %s301, 7
      %s304 = smul.addr %s303, 8
      %s305 = scalar_lea.vmem %s3, %s304
      %s306 = smul.u32 4, %s36
      %s307 = smul.u32 4, %s36
      %p308 = scmp.lt.s32.totalorder %s307, 7
      %s309 = scalar_select %p308, %s307, 7
      %s310 = smul.addr %s309, 4
      %s311 = scalar_lea.vmem %s4, %s310
      %s312 = smul.u32 4, %s36
      %s313 = smul.u32 4, %s36
      %p314 = scmp.lt.s32.totalorder %s313, 7
      %s315 = scalar_select %p314, %s313, 7
      %s316 = smul.addr %s315, 4
      %s317 = scalar_lea.vmem %s10, %s316
      %s318 = smul.u32 4, %s36
      %p320 = scmp.eq.s32.totalorder %s36, 0
      // Predicated region
      $region45: #{tpu_custom_call.1} parent=43 // pred_check
        %p321 = pneg %p320
      $region46: #{tpu_custom_call.1} parent=43 // pred_check_branch
        %323 = sbr.rel (%p321) target = $region48
      $region47: #{tpu_custom_call.1} parent=43 // pred_region
        %vm324 = vcmask 130048
        %325 = vst.msk [vmem:[%s9] sm:$0xff] %vm324, -inf
        %326 = vst.msk [vmem:[%s9 + $0x8] sm:$0xff] %vm324, -inf
        %327 = vst.msk [vmem:[%s9 + $0x10] sm:$0xff] %vm324, -inf
      $region48: #{tpu_custom_call.1} parent=43 // pred_fallthru
        _
      %v328 = vld [vmem:[%s311] sm:$0xf]
      %v329 = vld [vmem:[%s311 + $0x4] sm:$0xf]
      %v330 = vld [vmem:[%s311 + $0x8] sm:$0xf]
      %v331 = vld [vmem:[%s311 + $0xc] sm:$0xf]
      %v332 = vld [vmem:[%s5] sm:$0xf]
      %v333 = vld [vmem:[%s5 + $0x4] sm:$0xf]
      %v334 = vld [vmem:[%s6] sm:$0x1]
      %v336 = vlaneseq
      %v337 = vshrl.u32 %v336, 7
      %v338 = vsub.s32 0, %v337
      %v339 = vrot.slane %v334, %v338
      %v345 = vunpack.c.l.b16 %v328
      %v346 = vunpack.c.l.b16 %v329
      %v347 = vunpack.c.l.b16 %v330
      %v348 = vunpack.c.l.b16 %v331
      %v349 = vpack.c.b16 %v346, %v345
      %v350 = vpack.c.b16 %v348, %v347
      %v353 = vunpack.c.l.b16 %v332
      %v354 = vunpack.c.l.b16 %v333
      %v355 = vpack.c.b16 %v354, %v353
      %vm357 = vcmask 130048
      %v359 = vsel %vm357, %v349, 0
      %v362 = vsel %vm357, %v350, 0
      %364 = vmatprep.subr.bf16.mxu0 0
      %365 = vmatpush1.bf16.msra.mxu0 0
      %366 = vmatprep.subr.bf16.mxu0 0
      %367 = vmatpush1.bf16.msra.mxu0 0
      %368 = vmatprep.subr.bf16.mxu0 0
      %369 = vmatpush1.bf16.msra.mxu0 0
      %370 = vmatprep.subr.bf16.mxu0 0
      %371 = vmatpush1.bf16.msra.mxu0 0
      %372 = vmatprep.subr.bf16.mxu0 0
      %373 = vmatpush1.bf16.msra.mxu0 0
      %374 = vmatprep.subr.bf16.mxu0 0
      %375 = vmatpush1.bf16.msra.mxu0 0
      %376 = vmatprep.subr.bf16.mxu0 0
      %377 = vmatpush1.bf16.msra.mxu0 0
      %378 = vmatprep.subr.bf16.mxu0 0
      %379 = vmatpush1.bf16.msra.mxu0 %v355
      %380 = vmatprep.subr.bf16.mxu0 0
      %381 = vmatpush2.bf16.msra.mxu0 0
      %382 = vmatprep.subr.bf16.mxu0 0
      %383 = vmatpush2.bf16.msra.mxu0 0
      %384 = vmatprep.subr.bf16.mxu0 0
      %385 = vmatpush2.bf16.msra.mxu0 0
      %386 = vmatprep.subr.bf16.mxu0 0
      %387 = vmatpush2.bf16.msra.mxu0 0
      %388 = vmatprep.subr.bf16.mxu0 0
      %389 = vmatpush2.bf16.msra.mxu0 0
      %390 = vmatprep.subr.bf16.mxu0 0
      %391 = vmatpush2.bf16.msra.mxu0 0
      %392 = vmatprep.subr.bf16.mxu0 0
      %393 = vmatpush2.bf16.msra.mxu0 0
      %394 = vmatprep.subr.bf16.mxu0 0
      %395 = vmatpush2.bf16.msra.mxu0 0
      %396 = vmatprep.mubr.bf16.mxu0 0
      %397 = vmatmul.mubr.bf16.gmra.mxu0 %v359
      %v398 = vpop.f32.mrf.mxu0
      %v399 = vadd.f32 %v339, %v398
      %v400 = vpop.f32.mrf.mxu0
      %v401 = vpop.f32.mrf.mxu0
      %v402 = vadd.f32 %v339, %v401
      %v403 = vpop.f32.mrf.mxu0
      %404 = vmatprep.mubr.bf16.mxu0 0
      %405 = vmatmul.mubr.bf16.gmra.mxu0 %v362
      %v406 = vpop.f32.mrf.mxu0
      %v407 = vadd.f32 %v339, %v406
      %v408 = vpop.f32.mrf.mxu0
      %v409 = vpop.f32.mrf.mxu0
      %v410 = vadd.f32 %v339, %v409
      %v411 = vpop.f32.mrf.mxu0
      %412 = vdwg.mxu0
      %v413 = vmax.f32 %v399, 0.0
      %v414 = vmax.f32 %v402, 0.0
      %v415 = vmax.f32 %v407, 0.0
      %v416 = vmax.f32 %v410, 0.0
      %v417 = vpack.c.bf16 %v414, %v413
      %v418 = vpack.c.bf16 %v416, %v415
      %v419 = vld [vmem:[%s7] sm:$0xf]
      %v420 = vld [vmem:[%s7 + $0x4] sm:$0xf]
      %v421 = vld [vmem:[%s7 + $0x8] sm:$0xf]
      %v422 = vld [vmem:[%s7 + $0xc] sm:$0xf]
      %v423 = vld [vmem:[%s8] sm:$0x1]
      %v425 = vlaneseq
      %v426 = vshrl.u32 %v425, 7
      %v427 = vsub.s32 0, %v426
      %v428 = vrot.slane %v423, %v427
      %v434 = vunpack.c.l.b16 %v419
      %v435 = vunpack.c.l.b16 %v420
      %v436 = vunpack.c.l.b16 %v421
      %v437 = vunpack.c.l.b16 %v422
      %v438 = vpack.c.b16 %v435, %v434
      %v439 = vpack.c.b16 %v437, %v436
      %vm442 = vcmask 261120
      %v444 = vsel %vm442, %v417, 0
      %v447 = vsel %vm442, %v418, 0
      %449 = vmatprep.subr.bf16.mxu0 0
      %450 = vmatpush1.bf16.msra.mxu0 0
      %451 = vmatprep.subr.bf16.mxu0 0
      %452 = vmatpush1.bf16.msra.mxu0 0
      %453 = vmatprep.subr.bf16.mxu0 0
      %454 = vmatpush1.bf16.msra.mxu0 0
      %455 = vmatprep.subr.bf16.mxu0 0
      %456 = vmatpush1.bf16.msra.mxu0 0
      %457 = vmatprep.subr.bf16.mxu0 0
      %458 = vmatpush1.bf16.msra.mxu0 0
      %459 = vmatprep.subr.bf16.mxu0 0
      %460 = vmatpush1.bf16.msra.mxu0 0
      %461 = vmatprep.subr.bf16.mxu0 0
      %462 = vmatpush1.bf16.msra.mxu0 %v439
      %463 = vmatprep.subr.bf16.mxu0 0
      %464 = vmatpush1.bf16.msra.mxu0 %v438
      %465 = vmatprep.subr.bf16.mxu0 0
      %466 = vmatpush2.bf16.msra.mxu0 0
      %467 = vmatprep.subr.bf16.mxu0 0
      %468 = vmatpush2.bf16.msra.mxu0 0
      %469 = vmatprep.subr.bf16.mxu0 0
      %470 = vmatpush2.bf16.msra.mxu0 0
      %471 = vmatprep.subr.bf16.mxu0 0
      %472 = vmatpush2.bf16.msra.mxu0 0
      %473 = vmatprep.subr.bf16.mxu0 0
      %474 = vmatpush2.bf16.msra.mxu0 0
      %475 = vmatprep.subr.bf16.mxu0 0
      %476 = vmatpush2.bf16.msra.mxu0 0
      %477 = vmatprep.subr.bf16.mxu0 0
      %478 = vmatpush2.bf16.msra.mxu0 0
      %479 = vmatprep.subr.bf16.mxu0 0
      %480 = vmatpush2.bf16.msra.mxu0 0
      %481 = vmatprep.mubr.bf16.mxu0 0
      %482 = vmatmul.mubr.bf16.gmra.mxu0 %v444
      %v483 = vpop.f32.mrf.mxu0
      %v484 = vadd.f32 %v428, %v483
      %v485 = vpop.f32.mrf.mxu0
      %v486 = vpop.f32.mrf.mxu0
      %v487 = vadd.f32 %v428, %v486
      %v488 = vpop.f32.mrf.mxu0
      %489 = vmatprep.mubr.bf16.mxu0 0
      %490 = vmatmul.mubr.bf16.gmra.mxu0 %v447
      %v491 = vpop.f32.mrf.mxu0
      %v492 = vadd.f32 %v428, %v491
      %v493 = vpop.f32.mrf.mxu0
      %v494 = vpop.f32.mrf.mxu0
      %v495 = vadd.f32 %v428, %v494
      %v496 = vpop.f32.mrf.mxu0
      %497 = vdwg.mxu0
      %v498 = vpack.c.bf16 %v487, %v484
      %v499 = vpack.c.bf16 %v495, %v492
      %v502 = vunpack.c.l.b16 %v498
      %v503 = vunpack.c.h.b16 %v498
      %v504 = vunpack.c.l.b16 %v499
      %v505 = vunpack.c.h.b16 %v499
      %v506 = vpack.c.b16 %v502, %v502
      %v507 = vpack.c.b16 %v503, %v503
      %v508 = vpack.c.b16 %v504, %v504
      %v509 = vpack.c.b16 %v505, %v505
      %vm514 = vcmask 125952
      %515 = vst.msk [vmem:[%s317] sm:$0xf] %vm514, %v506
      %516 = vst.msk [vmem:[%s317 + $0x4] sm:$0xf] %vm514, %v507
      %517 = vst.msk [vmem:[%s317 + $0x8] sm:$0xf] %vm514, %v508
      %518 = vst.msk [vmem:[%s317 + $0xc] sm:$0xf] %vm514, %v509
      %v519 = vld [vmem:[%s305] sm:$0xff]
      %v520 = vld [vmem:[%s305 + $0x8] sm:$0xff]
      %v521 = vld [vmem:[%s305 + $0x10] sm:$0xff]
      %v522 = vld [vmem:[%s305 + $0x18] sm:$0xff]
      %v523 = vrot.slane %v519, 7
      %v524 = vrot.slane %v520, 7
      %v525 = vrot.slane %v521, 7
      %v526 = vrot.slane %v522, 7
      %v527 = vlaneseq
      %v528 = vshrl.u32 %v527, 7
      %vm529 = vcmp.lt.s32.totalorder %v528, 1
      %v530 = vsel %vm529, %v525, %v526
      %v531 = vsel %vm529, %v524, %v525
      %v532 = vsel %vm529, %v523, %v524
      %v533 = vsel %vm529, %v526, %v523
      %v534 = vrot.slane %v484, 7
      %v535 = vrot.slane %v487, 7
      %v536 = vrot.slane %v492, 7
      %v537 = vrot.slane %v495, 7
      %v538 = vsel %vm529, %v536, %v537
      %v539 = vsel %vm529, %v535, %v536
      %v540 = vsel %vm529, %v534, %v535
      %v541 = vsel %vm529, %v537, %v534
      %v542 = vrot.slane %v519, 1
      %v543 = vrot.slane %v520, 1
      %v544 = vrot.slane %v521, 1
      %v545 = vrot.slane %v522, 1
      %vm546 = vcmp.lt.s32.totalorder %v528, 7
      %v547 = vsel %vm546, %v544, %v545
      %v548 = vsel %vm546, %v543, %v544
      %v549 = vsel %vm546, %v542, %v543
      %v550 = vsel %vm546, %v545, %v542
      %v551 = vrot.slane %v484, 1
      %v552 = vrot.slane %v487, 1
      %v553 = vrot.slane %v492, 1
      %v554 = vrot.slane %v495, 1
      %v555 = vsel %vm546, %v553, %v554
      %v556 = vsel %vm546, %v552, %v553
      %v557 = vsel %vm546, %v551, %v552
      %v558 = vsel %vm546, %v554, %v551
      %vm559 = vcmp.eq.s32.totalorder %v533, %v519
      %vm560 = vcmp.eq.s32.totalorder %v532, %v520
      %vm561 = vcmp.eq.s32.totalorder %v531, %v521
      %vm562 = vcmp.eq.s32.totalorder %v530, %v522
      %v563 = vsel %vm559, 1, 0
      %v564 = vsel %vm560, 1, 0
      %v565 = vsel %vm561, 1, 0
      %v566 = vsel %vm562, 1, 0
      %567 = vset.pattern.permute.xlu0 0
      %568 = vperm.xlu0 %567, %v563
      %v569 = vpop.permute.xlu0 %568
      %570 = vset.pattern.permute.xlu0 0
      %571 = vperm.xlu0 %570, %v564
      %v572 = vpop.permute.xlu0 %571
      %573 = vset.pattern.permute.xlu0 0
      %574 = vperm.xlu0 %573, %v565
      %v575 = vpop.permute.xlu0 %574
      %576 = vset.pattern.permute.xlu0 0
      %577 = vperm.xlu0 %576, %v566
      %v578 = vpop.permute.xlu0 %577
      %vm579 = vcmp.eq.s32.totalorder %v569, 1
      %vm580 = vcmp.eq.s32.totalorder %v572, 1
      %vm581 = vcmp.eq.s32.totalorder %v575, 1
      %vm582 = vcmp.eq.s32.totalorder %v578, 1
      %v583 = vsel %vm579, %v541, -inf
      %v584 = vsel %vm580, %v540, -inf
      %v585 = vsel %vm581, %v539, -inf
      %v586 = vsel %vm582, %v538, -inf
      %v587 = vmax.f32 %v484, %v583
      %v588 = vmax.f32 %v487, %v584
      %v589 = vmax.f32 %v492, %v585
      %v590 = vmax.f32 %v495, %v586
      %vm591 = vcmp.eq.s32.totalorder %v549, %v519
      %vm592 = vcmp.eq.s32.totalorder %v548, %v520
      %vm593 = vcmp.eq.s32.totalorder %v547, %v521
      %vm594 = vcmp.eq.s32.totalorder %v550, %v522
      %v595 = vsel %vm591, 1, 0
      %v596 = vsel %vm592, 1, 0
      %v597 = vsel %vm593, 1, 0
      %v598 = vsel %vm594, 1, 0
      %599 = vset.pattern.permute.xlu0 0
      %600 = vperm.xlu0 %599, %v595
      %v601 = vpop.permute.xlu0 %600
      %602 = vset.pattern.permute.xlu0 0
      %603 = vperm.xlu0 %602, %v596
      %v604 = vpop.permute.xlu0 %603
      %605 = vset.pattern.permute.xlu0 0
      %606 = vperm.xlu0 %605, %v597
      %v607 = vpop.permute.xlu0 %606
      %608 = vset.pattern.permute.xlu0 0
      %609 = vperm.xlu0 %608, %v598
      %v610 = vpop.permute.xlu0 %609
      %vm611 = vcmp.eq.s32.totalorder %v601, 1
      %vm612 = vcmp.eq.s32.totalorder %v604, 1
      %vm613 = vcmp.eq.s32.totalorder %v607, 1
      %vm614 = vcmp.eq.s32.totalorder %v610, 1
      %v615 = vsel %vm611, %v557, -inf
      %v616 = vsel %vm612, %v556, -inf
      %v617 = vsel %vm613, %v555, -inf
      %v618 = vsel %vm614, %v558, -inf
      %v619 = vmax.f32 %v587, %v615
      %v620 = vmax.f32 %v588, %v616
      %v621 = vmax.f32 %v589, %v617
      %v622 = vmax.f32 %v590, %v618
      %v623 = vrot.slane %v519, 6
      %v624 = vrot.slane %v520, 6
      %v625 = vrot.slane %v521, 6
      %v626 = vrot.slane %v522, 6
      %vm627 = vcmp.lt.s32.totalorder %v528, 2
      %v628 = vsel %vm627, %v625, %v626
      %v629 = vsel %vm627, %v624, %v625
      %v630 = vsel %vm627, %v623, %v624
      %v631 = vsel %vm627, %v626, %v623
      %v632 = vrot.slane %v619, 6
      %v633 = vrot.slane %v620, 6
      %v634 = vrot.slane %v621, 6
      %v635 = vrot.slane %v622, 6
      %v636 = vsel %vm627, %v634, %v635
      %v637 = vsel %vm627, %v633, %v634
      %v638 = vsel %vm627, %v632, %v633
      %v639 = vsel %vm627, %v635, %v632
      %v640 = vrot.slane %v519, 2
      %v641 = vrot.slane %v520, 2
      %v642 = vrot.slane %v521, 2
      %v643 = vrot.slane %v522, 2
      %vm644 = vcmp.lt.s32.totalorder %v528, 6
      %v645 = vsel %vm644, %v642, %v643
      %v646 = vsel %vm644, %v641, %v642
      %v647 = vsel %vm644, %v640, %v641
      %v648 = vsel %vm644, %v643, %v640
      %v649 = vrot.slane %v619, 2
      %v650 = vrot.slane %v620, 2
      %v651 = vrot.slane %v621, 2
      %v652 = vrot.slane %v622, 2
      %v653 = vsel %vm644, %v651, %v652
      %v654 = vsel %vm644, %v650, %v651
      %v655 = vsel %vm644, %v649, %v650
      %v656 = vsel %vm644, %v652, %v649
      %vm657 = vcmp.eq.s32.totalorder %v631, %v519
      %vm658 = vcmp.eq.s32.totalorder %v630, %v520
      %vm659 = vcmp.eq.s32.totalorder %v629, %v521
      %vm660 = vcmp.eq.s32.totalorder %v628, %v522
      %v661 = vsel %vm657, 1, 0
      %v662 = vsel %vm658, 1, 0
      %v663 = vsel %vm659, 1, 0
      %v664 = vsel %vm660, 1, 0
      %665 = vset.pattern.permute.xlu0 0
      %666 = vperm.xlu0 %665, %v661
      %v667 = vpop.permute.xlu0 %666
      %668 = vset.pattern.permute.xlu0 0
      %669 = vperm.xlu0 %668, %v662
      %v670 = vpop.permute.xlu0 %669
      %671 = vset.pattern.permute.xlu0 0
      %672 = vperm.xlu0 %671, %v663
      %v673 = vpop.permute.xlu0 %672
      %674 = vset.pattern.permute.xlu0 0
      %675 = vperm.xlu0 %674, %v664
      %v676 = vpop.permute.xlu0 %675
      %vm677 = vcmp.eq.s32.totalorder %v667, 1
      %vm678 = vcmp.eq.s32.totalorder %v670, 1
      %vm679 = vcmp.eq.s32.totalorder %v673, 1
      %vm680 = vcmp.eq.s32.totalorder %v676, 1
      %v681 = vsel %vm677, %v639, -inf
      %v682 = vsel %vm678, %v638, -inf
      %v683 = vsel %vm679, %v637, -inf
      %v684 = vsel %vm680, %v636, -inf
      %v685 = vmax.f32 %v619, %v681
      %v686 = vmax.f32 %v620, %v682
      %v687 = vmax.f32 %v621, %v683
      %v688 = vmax.f32 %v622, %v684
      %vm689 = vcmp.eq.s32.totalorder %v647, %v519
      %vm690 = vcmp.eq.s32.totalorder %v646, %v520
      %vm691 = vcmp.eq.s32.totalorder %v645, %v521
      %vm692 = vcmp.eq.s32.totalorder %v648, %v522
      %v693 = vsel %vm689, 1, 0
      %v694 = vsel %vm690, 1, 0
      %v695 = vsel %vm691, 1, 0
      %v696 = vsel %vm692, 1, 0
      %697 = vset.pattern.permute.xlu0 0
      %698 = vperm.xlu0 %697, %v693
      %v699 = vpop.permute.xlu0 %698
      %700 = vset.pattern.permute.xlu0 0
      %701 = vperm.xlu0 %700, %v694
      %v702 = vpop.permute.xlu0 %701
      %703 = vset.pattern.permute.xlu0 0
      %704 = vperm.xlu0 %703, %v695
      %v705 = vpop.permute.xlu0 %704
      %706 = vset.pattern.permute.xlu0 0
      %707 = vperm.xlu0 %706, %v696
      %v708 = vpop.permute.xlu0 %707
      %vm709 = vcmp.eq.s32.totalorder %v699, 1
      %vm710 = vcmp.eq.s32.totalorder %v702, 1
      %vm711 = vcmp.eq.s32.totalorder %v705, 1
      %vm712 = vcmp.eq.s32.totalorder %v708, 1
      %v713 = vsel %vm709, %v655, -inf
      %v714 = vsel %vm710, %v654, -inf
      %v715 = vsel %vm711, %v653, -inf
      %v716 = vsel %vm712, %v656, -inf
      %v717 = vmax.f32 %v685, %v713
      %v718 = vmax.f32 %v686, %v714
      %v719 = vmax.f32 %v687, %v715
      %v720 = vmax.f32 %v688, %v716
      %v721 = vrot.slane %v519, 4
      %v722 = vrot.slane %v520, 4
      %v723 = vrot.slane %v521, 4
      %v724 = vrot.slane %v522, 4
      %vm725 = vcmp.lt.s32.totalorder %v528, 4
      %v726 = vsel %vm725, %v723, %v724
      %v727 = vsel %vm725, %v722, %v723
      %v728 = vsel %vm725, %v721, %v722
      %v729 = vsel %vm725, %v724, %v721
      %v730 = vrot.slane %v717, 4
      %v731 = vrot.slane %v718, 4
      %v732 = vrot.slane %v719, 4
      %v733 = vrot.slane %v720, 4
      %v734 = vsel %vm725, %v732, %v733
      %v735 = vsel %vm725, %v731, %v732
      %v736 = vsel %vm725, %v730, %v731
      %v737 = vsel %vm725, %v733, %v730
      %vm738 = vcmp.eq.s32.totalorder %v729, %v519
      %vm739 = vcmp.eq.s32.totalorder %v728, %v520
      %vm740 = vcmp.eq.s32.totalorder %v727, %v521
      %vm741 = vcmp.eq.s32.totalorder %v726, %v522
      %v742 = vsel %vm738, 1, 0
      %v743 = vsel %vm739, 1, 0
      %v744 = vsel %vm740, 1, 0
      %v745 = vsel %vm741, 1, 0
      %746 = vset.pattern.permute.xlu0 0
      %747 = vperm.xlu0 %746, %v742
      %v748 = vpop.permute.xlu0 %747
      %749 = vset.pattern.permute.xlu0 0
      %750 = vperm.xlu0 %749, %v743
      %v751 = vpop.permute.xlu0 %750
      %752 = vset.pattern.permute.xlu0 0
      %753 = vperm.xlu0 %752, %v744
      %v754 = vpop.permute.xlu0 %753
      %755 = vset.pattern.permute.xlu0 0
      %756 = vperm.xlu0 %755, %v745
      %v757 = vpop.permute.xlu0 %756
      %vm758 = vcmp.eq.s32.totalorder %v748, 1
      %vm759 = vcmp.eq.s32.totalorder %v751, 1
      %vm760 = vcmp.eq.s32.totalorder %v754, 1
      %vm761 = vcmp.eq.s32.totalorder %v757, 1
      %v762 = vsel %vm758, %v737, -inf
      %v763 = vsel %vm759, %v736, -inf
      %v764 = vsel %vm760, %v735, -inf
      %v765 = vsel %vm761, %v734, -inf
      %v766 = vmax.f32 %v717, %v762
      %v767 = vmax.f32 %v718, %v763
      %v768 = vmax.f32 %v719, %v764
      %v769 = vmax.f32 %v720, %v765
      %vm770 = vcmp.eq.s32.totalorder %v728, %v519
      %vm771 = vcmp.eq.s32.totalorder %v727, %v520
      %vm772 = vcmp.eq.s32.totalorder %v726, %v521
      %vm773 = vcmp.eq.s32.totalorder %v729, %v522
      %v774 = vsel %vm770, 1, 0
      %v775 = vsel %vm771, 1, 0
      %v776 = vsel %vm772, 1, 0
      %v777 = vsel %vm773, 1, 0
      %778 = vset.pattern.permute.xlu0 0
      %779 = vperm.xlu0 %778, %v774
      %v780 = vpop.permute.xlu0 %779
      %781 = vset.pattern.permute.xlu0 0
      %782 = vperm.xlu0 %781, %v775
      %v783 = vpop.permute.xlu0 %782
      %784 = vset.pattern.permute.xlu0 0
      %785 = vperm.xlu0 %784, %v776
      %v786 = vpop.permute.xlu0 %785
      %787 = vset.pattern.permute.xlu0 0
      %788 = vperm.xlu0 %787, %v777
      %v789 = vpop.permute.xlu0 %788
      %vm790 = vcmp.eq.s32.totalorder %v780, 1
      %vm791 = vcmp.eq.s32.totalorder %v783, 1
      %vm792 = vcmp.eq.s32.totalorder %v786, 1
      %vm793 = vcmp.eq.s32.totalorder %v789, 1
      %v794 = vsel %vm790, %v736, -inf
      %v795 = vsel %vm791, %v735, -inf
      %v796 = vsel %vm792, %v734, -inf
      %v797 = vsel %vm793, %v737, -inf
      %v798 = vmax.f32 %v766, %v794
      %v799 = vmax.f32 %v767, %v795
      %v800 = vmax.f32 %v768, %v796
      %v801 = vmax.f32 %v769, %v797
      %vm802 = vcmp.eq.s32.totalorder %v522, %v519
      %vm803 = vcmp.eq.s32.totalorder %v519, %v520
      %vm804 = vcmp.eq.s32.totalorder %v520, %v521
      %vm805 = vcmp.eq.s32.totalorder %v521, %v522
      %v806 = vsel %vm802, 1, 0
      %v807 = vsel %vm803, 1, 0
      %v808 = vsel %vm804, 1, 0
      %v809 = vsel %vm805, 1, 0
      %810 = vset.pattern.permute.xlu0 0
      %811 = vperm.xlu0 %810, %v806
      %v812 = vpop.permute.xlu0 %811
      %813 = vset.pattern.permute.xlu0 0
      %814 = vperm.xlu0 %813, %v807
      %v815 = vpop.permute.xlu0 %814
      %816 = vset.pattern.permute.xlu0 0
      %817 = vperm.xlu0 %816, %v808
      %v818 = vpop.permute.xlu0 %817
      %819 = vset.pattern.permute.xlu0 0
      %820 = vperm.xlu0 %819, %v809
      %v821 = vpop.permute.xlu0 %820
      %vm822 = vcmp.eq.s32.totalorder %v812, 1
      %vm823 = vcmp.eq.s32.totalorder %v815, 1
      %vm824 = vcmp.eq.s32.totalorder %v818, 1
      %vm825 = vcmp.eq.s32.totalorder %v821, 1
      %v826 = vsel %vm822, %v801, -inf
      %v827 = vsel %vm823, %v798, -inf
      %v828 = vsel %vm824, %v799, -inf
      %v829 = vsel %vm825, %v800, -inf
      %v830 = vmax.f32 %v798, %v826
      %v831 = vmax.f32 %v799, %v827
      %v832 = vmax.f32 %v800, %v828
      %v833 = vmax.f32 %v801, %v829
      %vm834 = vcmp.eq.s32.totalorder %v520, %v519
      %vm835 = vcmp.eq.s32.totalorder %v521, %v520
      %vm836 = vcmp.eq.s32.totalorder %v522, %v521
      %vm837 = vcmp.eq.s32.totalorder %v519, %v522
      %v838 = vsel %vm834, 1, 0
      %v839 = vsel %vm835, 1, 0
      %v840 = vsel %vm836, 1, 0
      %v841 = vsel %vm837, 1, 0
      %842 = vset.pattern.permute.xlu0 0
      %843 = vperm.xlu0 %842, %v838
      %v844 = vpop.permute.xlu0 %843
      %845 = vset.pattern.permute.xlu0 0
      %846 = vperm.xlu0 %845, %v839
      %v847 = vpop.permute.xlu0 %846
      %848 = vset.pattern.permute.xlu0 0
      %849 = vperm.xlu0 %848, %v840
      %v850 = vpop.permute.xlu0 %849
      %851 = vset.pattern.permute.xlu0 0
      %852 = vperm.xlu0 %851, %v841
      %v853 = vpop.permute.xlu0 %852
      %vm854 = vcmp.eq.s32.totalorder %v844, 1
      %vm855 = vcmp.eq.s32.totalorder %v847, 1
      %vm856 = vcmp.eq.s32.totalorder %v850, 1
      %vm857 = vcmp.eq.s32.totalorder %v853, 1
      %v858 = vsel %vm854, %v799, -inf
      %v859 = vsel %vm855, %v800, -inf
      %v860 = vsel %vm856, %v801, -inf
      %v861 = vsel %vm857, %v798, -inf
      %v862 = vmax.f32 %v830, %v858
      %v863 = vmax.f32 %v831, %v859
      %v864 = vmax.f32 %v832, %v860
      %v865 = vmax.f32 %v833, %v861
      %vm866 = vcmp.eq.s32.totalorder %v521, %v519
      %vm867 = vcmp.eq.s32.totalorder %v522, %v520
      %vm868 = vcmp.eq.s32.totalorder %v519, %v521
      %vm869 = vcmp.eq.s32.totalorder %v520, %v522
      %v870 = vsel %vm866, 1, 0
      %v871 = vsel %vm867, 1, 0
      %v872 = vsel %vm868, 1, 0
      %v873 = vsel %vm869, 1, 0
      %874 = vset.pattern.permute.xlu0 0
      %875 = vperm.xlu0 %874, %v870
      %v876 = vpop.permute.xlu0 %875
      %877 = vset.pattern.permute.xlu0 0
      %878 = vperm.xlu0 %877, %v871
      %v879 = vpop.permute.xlu0 %878
      %880 = vset.pattern.permute.xlu0 0
      %881 = vperm.xlu0 %880, %v872
      %v882 = vpop.permute.xlu0 %881
      %883 = vset.pattern.permute.xlu0 0
      %884 = vperm.xlu0 %883, %v873
      %v885 = vpop.permute.xlu0 %884
      %vm886 = vcmp.eq.s32.totalorder %v876, 1
      %vm887 = vcmp.eq.s32.totalorder %v879, 1
      %vm888 = vcmp.eq.s32.totalorder %v882, 1
      %vm889 = vcmp.eq.s32.totalorder %v885, 1
      %v890 = vsel %vm886, %v864, -inf
      %v891 = vsel %vm887, %v865, -inf
      %v892 = vsel %vm888, %v862, -inf
      %v893 = vsel %vm889, %v863, -inf
      %v894 = vmax.f32 %v862, %v890
      %v895 = vmax.f32 %v863, %v891
      %v896 = vmax.f32 %v864, %v892
      %v897 = vmax.f32 %v865, %v893
      %v898 = vmax.f32 %v894, %v890
      %v899 = vmax.f32 %v895, %v891
      %v900 = vmax.f32 %v896, %v892
      %v901 = vmax.f32 %v897, %v893
      %902 = vst.msk [vmem:[#allocation2] sm:$0xff] %vm357, %v898
      %903 = vst.msk [vmem:[#allocation2 + $0x8] sm:$0xff] %vm357, %v899
      %904 = vst.msk [vmem:[#allocation2 + $0x10] sm:$0xff] %vm357, %v900
      %905 = vst.msk [vmem:[#allocation2 + $0x18] sm:$0xff] %vm357, %v901
      %s906 = sld [smem:[#allocation4 + %s36]]
      %s907 = sld [smem:[#allocation5 + %s36]]
      %s908 = smul.u32 %s36, 32
      %s909 = sadd.s32 %s907, 1
      // While loop
      $region49: #{tpu_custom_call.1} parent=43 // loop_pre_header
        _
      $region50: #{tpu_custom_call.1} parent=43 // loop_header
        %s911 = sphi %s906, %s913
        %p912 = scmp.ge.s32.totalorder %s911, %s909
      $region51: #{tpu_custom_call.1} parent=43 // loop_header_branch
        %915 = sbr.rel (%p912) target = $region55
      $region52: #{tpu_custom_call.1} parent=43 // loop_body
        %s916 = sld [smem:[#allocation6 + %s911]]
        %s917 = sadd.s32 %s911, 1
        %s918 = sld [smem:[#allocation6 + %s917]]
        %p919 = scmp.gt.s32.totalorder %s918, %s916
        // Predicated region
        $region56: #{tpu_custom_call.1} parent=52 // pred_check
          %p920 = pneg %p919
        $region57: #{tpu_custom_call.1} parent=52 // pred_check_branch
          %922 = sbr.rel (%p920) target = $region59
        $region58: #{tpu_custom_call.1} parent=52 // pred_region
          %s923 = sadd.s32 %s908, 32
          %p924 = scmp.lt.s32.totalorder %s918, %s923
          %s925 = scalar_select %p924, %s918, %s923
          %s926 = ssub.s32 %s925, 1
          %s927 = ssub.s32 %s926, %s908
          %p928 = scmp.gt.s32.totalorder %s927, 0
          %s929 = scalar_select %p928, %s927, 0
          %s930 = scalar_lea.vmem [#allocation2], %s929
          %v931 = vld [vmem:[%s930] sm:$0x1]
          %s932 = scalar_lea.vmem %s9, %s911
          %v933 = vld [vmem:[%s932] sm:$0x1]
          %v934 = vmax.f32 %v933, %v931
          %vm935 = vcmask 122880
          %936 = vst.msk [vmem:[%s932] sm:$0x1] %vm935, %v934
        $region59: #{tpu_custom_call.1} parent=52 // pred_fallthru
          _
      $region53: #{tpu_custom_call.1} parent=43 // loop_footer
        %s913 = sadd.s32 %s911, 1
      $region54: #{tpu_custom_call.1} parent=43 // loop_footer_branch
        %910 = sbr.rel target = $region50
      $region55: #{tpu_custom_call.1} parent=43 // loop_exit
        _
      %p937 = scmp.eq.s32.totalorder %s36, 1
      // Predicated region
      $region60: #{tpu_custom_call.1} parent=43 // pred_check
        %p938 = pneg %p937
      $region61: #{tpu_custom_call.1} parent=43 // pred_check_branch
        %940 = sbr.rel (%p938) target = $region63
      $region62: #{tpu_custom_call.1} parent=43 // pred_region
        %v941 = vld [vmem:[%s9] sm:$0xff]
        %v942 = vld [vmem:[%s9 + $0x8] sm:$0xff]
        %v943 = vld [vmem:[%s9 + $0x10] sm:$0xff]
        %vm944 = vcmp.gt.f32.partialorder %v941, -inf
        %vm945 = vcmp.gt.f32.partialorder %v942, -inf
        %vm946 = vcmp.gt.f32.partialorder %v943, -inf
        %v947 = vsel %vm944, %v941, 0.0
        %v948 = vsel %vm945, %v942, 0.0
        %v949 = vsel %vm946, %v943, 0.0
        %950 = vst.msk [vmem:[%s9] sm:$0xff] %vm357, %v947
        %951 = vst.msk [vmem:[%s9 + $0x8] sm:$0xff] %vm357, %v948
        %952 = vst.msk [vmem:[%s9 + $0x10] sm:$0xff] %vm357, %v949
      $region63: #{tpu_custom_call.1} parent=43 // pred_fallthru
        _
      %s953 = smul.u32 4, %s36
      %p954 = scmp.lt.s32.totalorder %s953, 7
      %s955 = scalar_select %p954, %s953, 7
      %s956 = smul.addr %s955, 4
      %s957 = scalar_lea.vmem %s10, %s956
      // Predicated region
      $region64: #{tpu_custom_call.1} parent=43 // pred_check
        %p958 = pneg %p185
      $region65: #{tpu_custom_call.1} parent=43 // pred_check_branch
        %960 = sbr.rel (%p958) target = $region67
      $region66: #{tpu_custom_call.1} parent=43 // pred_region
        _
      $region67: #{tpu_custom_call.1} parent=43 // pred_fallthru
        _
      // Predicated region
      $region68: #{tpu_custom_call.1} parent=43 // pred_check
        %p961 = pneg %p211
      $region69: #{tpu_custom_call.1} parent=43 // pred_check_branch
        %963 = sbr.rel (%p961) target = $region71
      $region70: #{tpu_custom_call.1} parent=43 // pred_region
        %s964 = smul.u32 4, %s36
      $region71: #{tpu_custom_call.1} parent=43 // pred_fallthru
        _
      // Predicated region
      $region72: #{tpu_custom_call.1} parent=43 // pred_check
        %p965 = pneg %p185
      $region73: #{tpu_custom_call.1} parent=43 // pred_check_branch
        %967 = sbr.rel (%p965) target = $region75
      $region74: #{tpu_custom_call.1} parent=43 // pred_region
        _
      $region75: #{tpu_custom_call.1} parent=43 // pred_fallthru
        _
    $region44: #{tpu_custom_call.1} parent=5 // pred_fallthru
      _
    %p968 = scmp.le.s32.totalorder 2, %s31
    // Predicated region
    $region76: #{tpu_custom_call.1} parent=5 // pred_check
      %p969 = pneg %p968
    $region77: #{tpu_custom_call.1} parent=5 // pred_check_branch
      %971 = sbr.rel (%p969) target = $region79
    $region78: #{tpu_custom_call.1} parent=5 // pred_region
      %s972 = ssub.s32 %s31, 2
      // Predicated region
      $region80: #{tpu_custom_call.1} parent=78 // pred_check
        %p973 = pneg %p217
      $region81: #{tpu_custom_call.1} parent=78 // pred_check_branch
        %975 = sbr.rel (%p973) target = $region83
      $region82: #{tpu_custom_call.1} parent=78 // pred_region
        %s976 = smul.u32 4, %s37
        %p977 = scmp.lt.s32.totalorder %s976, 7
        %s978 = scalar_select %p977, %s976, 7
        %s979 = smul.addr %s978, 4
        %s980 = scalar_lea.vmem %s10, %s979
      $region83: #{tpu_custom_call.1} parent=78 // pred_fallthru
        _
    $region79: #{tpu_custom_call.1} parent=5 // pred_fallthru
      _
  $region6: #{tpu_custom_call.1} parent=0 // loop_footer
    %s35 = sadd.s32 1, %s31
  $region7: #{tpu_custom_call.1} parent=0 // loop_footer_branch
    %30 = sbr.rel target = $region3
  $region8: #{tpu_custom_call.1} parent=0 // loop_exit
    _

</llo_original>
